<compile_context>
chip_gen: v6e
topology: v6e:2x2x1
jax: 0.10.0
libtpu: 0.0.40
codegen_flags: <defaults>
</compile_context>

<pallas_src>
import jax
import jax.numpy as jnp
from jax.experimental import pallas as pl
from jax.experimental.pallas import tpu as pltpu


def _vanilla_attn_kernel(x_ref, w1_ref, b1_ref, w2_ref, b2_ref, hid_ref, wts_ref):
    Bt, S, H = x_ref.shape
    A = w1_ref.shape[1]

    # One f32 slab for the whole batch tile (single cast if input is bf16).
    x = x_ref[...].astype(jnp.float32)                       # (Bt, S, H)

    # ---- projection MLP: Linear(H, A) -> ReLU -> Linear(A, 1) ----
    x2d = x.reshape(Bt * S, H)                                # big-M MXU matmul
    h = jnp.dot(x2d, w1_ref[...], preferred_element_type=jnp.float32)   # (Bt*S, A)
    h = jnp.maximum(h + b1_ref[...], 0.0)

    # Second Linear has N=1 -> do it on the VPU/XLU (multiply + lane reduce),
    # producing a lane-dense (Bt, S) energy slab (S along lanes).
    h3 = h.reshape(Bt, S, A)
    e = jnp.sum(h3 * w2_ref[...], axis=-1) + b2_ref[0]        # (Bt, S)

    # ---- softmax over the sequence axis (lane axis) ----
    m = jnp.max(e, axis=-1, keepdims=True)                    # (Bt, 1)
    p = jnp.exp(e - m)                                        # (Bt, S)
    denom = jnp.sum(p, axis=-1, keepdims=True)                # (Bt, 1)
    w = p * pl.reciprocal(denom, approx=True)                 # (Bt, S)

    # ---- weighted sum over the sequence axis ----
    hid = jnp.sum(x * w[:, :, None], axis=1)                  # (Bt, H)

    hid_ref[...] = hid.astype(hid_ref.dtype)                  # (Bt, H) lane-dense
    wts_ref[...] = w.astype(wts_ref.dtype)                    # (Bt, S) lane-dense


def _pick_batch_tile(B, S, H, itemsize, budget_bytes=8 << 20):
    """Largest divisor of B whose (bt, S, H) slab fits one ~8 MiB buffer
    (double-buffered x stays well inside v7x's 64 MiB VMEM), preferring
    sublane-aligned (multiple-of-8) tiles."""
    max_rows = max(1, budget_bytes // max(S * H * itemsize, 1))
    divs = [d for d in range(1, B + 1) if B % d == 0 and d <= max_rows]
    if not divs:
        return 1
    aligned = [d for d in divs if d % 8 == 0 or d == B]
    return max(aligned) if aligned else max(divs)


def vanilla_attention(x, w1, b1, w2, b2, *, bt=None):
    """x: (B, S, H); w1: (H, A); b1: (A,); w2: (A, 1); b2: (1,).
    Returns (hidden_states (B, H), weights (B, S))."""
    B, S, H = x.shape
    A = w1.shape[1]

    if bt is None:
        bt = _pick_batch_tile(B, S, H, x.dtype.itemsize)
    assert B % bt == 0, "batch tile must divide batch"

    # TODO(synk): for very long S an online-softmax sequence grid axis
    # ("arbitrary", running max/sum/acc scratch) would bound per-buffer VMEM;
    # not needed at these shapes.

    hidden, weights = pl.pallas_call(
        _vanilla_attn_kernel,
        out_shape=(
            jax.ShapeDtypeStruct((B, H), x.dtype),       # hidden_states
            jax.ShapeDtypeStruct((B, S), jnp.float32),   # weights (kept in f32)
        ),
        grid=(B // bt,),
        in_specs=[
            pl.BlockSpec((bt, S, H), lambda b: (b, 0, 0)),            # x tile
            pl.BlockSpec((H, A), lambda b: (0, 0)),                   # W1 (resident)
            pl.BlockSpec((1, A), lambda b: (0, 0)),                   # b1 row
            pl.BlockSpec((1, A), lambda b: (0, 0)),                   # W2 as row
            pl.BlockSpec(memory_space=pltpu.MemorySpace.SMEM),        # b2 scalar
        ],
        out_specs=(
            pl.BlockSpec((bt, H), lambda b: (b, 0)),
            pl.BlockSpec((bt, S), lambda b: (b, 0)),
        ),
        compiler_params=pltpu.CompilerParams(
            dimension_semantics=("parallel",),
            vmem_limit_bytes=32 << 20,
        ),
    )(x, w1, b1.reshape(1, A), w2.reshape(1, A), b2.reshape(1))

    return hidden, weights


def _reference(x, w1, b1, w2, b2):
    e = jnp.maximum(x @ w1 + b1, 0.0) @ w2 + b2        # (B, S, 1)
    weights = jax.nn.softmax(e[..., 0], axis=-1)       # (B, S)
    hidden = jnp.sum(x * weights[..., None], axis=-2)  # (B, H)
    return hidden, weights


if __name__ == "__main__":
    B, S, H, A = 16, 8, 32, 16

    key = jax.random.PRNGKey(0)
    kx, kw1, kb1, kw2, kb2 = jax.random.split(key, 5)

    x = jax.random.normal(kx, (B, S, H), dtype=jnp.float32)
    # deterministic synthetic parameters (shapes from nn.Linear(H, A), nn.Linear(A, 1))
    w1 = jax.random.normal(kw1, (H, A), dtype=jnp.float32) * (1.0 / jnp.sqrt(H))
    b1 = jax.random.normal(kb1, (A,), dtype=jnp.float32) * 0.1
    w2 = jax.random.normal(kw2, (A, 1), dtype=jnp.float32) * (1.0 / jnp.sqrt(A))
    b2 = jax.random.normal(kb2, (1,), dtype=jnp.float32) * 0.1

    # bt=8 -> 2 grid steps, exercises the batch-tiled path.
    hidden, weights = vanilla_attention(x, w1, b1, w2, b2, bt=8)
    jax.block_until_ready((hidden, weights))

    ref_hidden, ref_weights = _reference(x, w1, b1, w2, b2)
    assert hidden.shape == (B, H) and weights.shape == (B, S)
    # tolerance slightly loosened for the approximate (EUP) softmax reciprocal
    assert jnp.allclose(weights, ref_weights, atol=2e-3, rtol=2e-3)
    assert jnp.allclose(hidden, ref_hidden, atol=2e-3, rtol=2e-3)

    print("KERNEL_OK")
</pallas_src>

<mosaic_0001>
module attributes {stable_mosaic.version = 11 : i64} {
  func.func @_vanilla_attn_kernel(%arg0: i32, %arg1: memref<8x8x32xf32, #tpu.memory_space<vmem>>, %arg2: memref<32x16xf32, #tpu.memory_space<vmem>>, %arg3: memref<1x16xf32, #tpu.memory_space<vmem>>, %arg4: memref<1x16xf32, #tpu.memory_space<vmem>>, %arg5: memref<1xf32, #tpu.memory_space<smem>>, %arg6: memref<8x32xf32, #tpu.memory_space<vmem>>, %arg7: memref<8x8xf32, #tpu.memory_space<vmem>>) attributes {dimension_semantics = [#tpu.dimension_semantics<parallel>], iteration_bounds = array<i64: 2>, scalar_prefetch = 0 : i64, scratch_operands = 0 : i64, tpu.core_type = #tpu.core_type<tc>, window_params = [{transform_indices = @transform_0, window_bounds = array<i64: 8, 8, 32>}, {pipeline_mode = #tpu.pipeline_mode<synchronous>, transform_indices = @transform_1, window_bounds = array<i64: 32, 16>}, {pipeline_mode = #tpu.pipeline_mode<synchronous>, transform_indices = @transform_2, window_bounds = array<i64: 1, 16>}, {pipeline_mode = #tpu.pipeline_mode<synchronous>, transform_indices = @transform_3, window_bounds = array<i64: 1, 16>}, {transform_indices = @transform_4, window_bounds = array<i64: 1>}, {transform_indices = @transform_5, window_bounds = array<i64: 8, 32>}, {transform_indices = @transform_6, window_bounds = array<i64: 8, 8>}]} {
    %c0 = arith.constant 0 : index
    %c0_0 = arith.constant 0 : index
    %c0_1 = arith.constant 0 : index
    %0 = vector.load %arg1[%c0, %c0_0, %c0_1] : memref<8x8x32xf32, #tpu.memory_space<vmem>>, vector<8x8x32xf32>
    %1 = vector.shape_cast %0 : vector<8x8x32xf32> to vector<64x32xf32>
    %c0_2 = arith.constant 0 : index
    %c0_3 = arith.constant 0 : index
    %2 = vector.load %arg2[%c0_2, %c0_3] : memref<32x16xf32, #tpu.memory_space<vmem>>, vector<32x16xf32>
    %cst = arith.constant dense<0.000000e+00> : vector<64x16xf32>
    %3 = tpu.matmul %1, %2, %cst {dimension_numbers = #tpu.dot_dimension_numbers<[1], [0], [0], [1], [0, 0, 1, 1], [], []>} : vector<64x32xf32>, vector<32x16xf32>, vector<64x16xf32> -> vector<64x16xf32>
    %c0_4 = arith.constant 0 : index
    %c0_5 = arith.constant 0 : index
    %4 = vector.load %arg3[%c0_4, %c0_5] : memref<1x16xf32, #tpu.memory_space<vmem>>, vector<1x16xf32>
    %5 = vector.broadcast %4 : vector<1x16xf32> to vector<64x16xf32>
    %6 = arith.addf %3, %5 : vector<64x16xf32>
    %cst_6 = arith.constant 0.000000e+00 : f32
    %7 = vector.broadcast %cst_6 : f32 to vector<64x16xf32>
    %8 = arith.maximumf %6, %7 : vector<64x16xf32>
    %9 = vector.shape_cast %8 : vector<64x16xf32> to vector<8x8x16xf32>
    %c0_7 = arith.constant 0 : index
    %c0_8 = arith.constant 0 : index
    %10 = vector.load %arg4[%c0_7, %c0_8] : memref<1x16xf32, #tpu.memory_space<vmem>>, vector<1x16xf32>
    %11 = vector.shape_cast %10 : vector<1x16xf32> to vector<1x1x16xf32>
    %12 = vector.broadcast %11 : vector<1x1x16xf32> to vector<8x8x16xf32>
    %13 = arith.mulf %9, %12 : vector<8x8x16xf32>
    %cst_9 = arith.constant dense<0.000000e+00> : vector<8x8xf32>
    %14 = vector.multi_reduction <add>, %13, %cst_9 [2] : vector<8x8x16xf32> to vector<8x8xf32>
    %c0_10 = arith.constant 0 : index
    %15 = memref.load %arg5[%c0_10] : memref<1xf32, #tpu.memory_space<smem>>
    %16 = vector.broadcast %15 : f32 to vector<8x8xf32>
    %17 = arith.addf %14, %16 : vector<8x8xf32>
    %cst_11 = arith.constant dense<0xFF800000> : vector<8xf32>
    %18 = vector.multi_reduction <maximumf>, %17, %cst_11 [1] : vector<8x8xf32> to vector<8xf32>
    %19 = vector.shape_cast %18 : vector<8xf32> to vector<8x1xf32>
    %20 = vector.broadcast %19 : vector<8x1xf32> to vector<8x8xf32>
    %21 = arith.subf %17, %20 : vector<8x8xf32>
    %22 = math.exp %21 : vector<8x8xf32>
    %cst_12 = arith.constant dense<0.000000e+00> : vector<8xf32>
    %23 = vector.multi_reduction <add>, %22, %cst_12 [1] : vector<8x8xf32> to vector<8xf32>
    %24 = vector.shape_cast %23 : vector<8xf32> to vector<8x1xf32>
    %25 = tpu.reciprocal %24 {approx = true} : vector<8x1xf32> -> vector<8x1xf32>
    %26 = vector.broadcast %25 : vector<8x1xf32> to vector<8x8xf32>
    %27 = arith.mulf %22, %26 : vector<8x8xf32>
    %28 = vector.shape_cast %27 : vector<8x8xf32> to vector<8x8x1xf32>
    %29 = vector.broadcast %28 : vector<8x8x1xf32> to vector<8x8x32xf32>
    %30 = arith.mulf %0, %29 : vector<8x8x32xf32>
    %cst_13 = arith.constant dense<0.000000e+00> : vector<8x32xf32>
    %31 = vector.multi_reduction <add>, %30, %cst_13 [1] : vector<8x8x32xf32> to vector<8x32xf32>
    %c0_14 = arith.constant 0 : index
    %c0_15 = arith.constant 0 : index
    %32 = vector.load %arg6[%c0_14, %c0_15] : memref<8x32xf32, #tpu.memory_space<vmem>>, vector<8x32xf32>
    tpu.vector_store %arg6[%c0_14, %c0_15], %31 {strides = array<i32>} : memref<8x32xf32, #tpu.memory_space<vmem>>, vector<8x32xf32>,
    %c0_16 = arith.constant 0 : index
    %c0_17 = arith.constant 0 : index
    %33 = vector.load %arg7[%c0_16, %c0_17] : memref<8x8xf32, #tpu.memory_space<vmem>>, vector<8x8xf32>
    tpu.vector_store %arg7[%c0_16, %c0_17], %27 {strides = array<i32>} : memref<8x8xf32, #tpu.memory_space<vmem>>, vector<8x8xf32>,
    return
  }
  func.func @transform_0(%arg0: i32) -> (i32, i32, i32) {
    %c0_i32 = arith.constant 0 : i32
    %c0_i32_0 = arith.constant 0 : i32
    %c0_i32_1 = arith.constant 0 : i32
    return %arg0, %c0_i32, %c0_i32_0 : i32, i32, i32
  }
  func.func @transform_1(%arg0: i32) -> (i32, i32) {
    %c0_i32 = arith.constant 0 : i32
    %c0_i32_0 = arith.constant 0 : i32
    %c0_i32_1 = arith.constant 0 : i32
    return %c0_i32, %c0_i32_0 : i32, i32
  }
  func.func @transform_2(%arg0: i32) -> (i32, i32) {
    %c0_i32 = arith.constant 0 : i32
    %c0_i32_0 = arith.constant 0 : i32
    %c0_i32_1 = arith.constant 0 : i32
    return %c0_i32, %c0_i32_0 : i32, i32
  }
  func.func @transform_3(%arg0: i32) -> (i32, i32) {
    %c0_i32 = arith.constant 0 : i32
    %c0_i32_0 = arith.constant 0 : i32
    %c0_i32_1 = arith.constant 0 : i32
    return %c0_i32, %c0_i32_0 : i32, i32
  }
  func.func @transform_4(%arg0: i32) -> i32 {
    %c0_i32 = arith.constant 0 : i32
    %c0_i32_0 = arith.constant 0 : i32
    return %c0_i32 : i32
  }
  func.func @transform_5(%arg0: i32) -> (i32, i32) {
    %c0_i32 = arith.constant 0 : i32
    %c0_i32_0 = arith.constant 0 : i32
    return %arg0, %c0_i32 : i32, i32
  }
  func.func @transform_6(%arg0: i32) -> (i32, i32) {
    %c0_i32 = arith.constant 0 : i32
    %c0_i32_0 = arith.constant 0 : i32
    return %arg0, %c0_i32 : i32, i32
  }
}

</mosaic_0001>

<llo_original>
// kernel: tpu_custom_call.1
$region0: #{tpu_custom_call.1}
  #allocation0 [shape = 'u32[]', space=smem, size = 0x4, offset = 0x4, fixed_abs, tag = 'smem constant byte address 0x4 - core index']
  #allocation1 [shape = 'u32[144,128]{1,0:T(1,128)}', space=vmem, size = 0x12000, scoped, tag = 'internal scratch']
  #allocation2 [shape = 'f32[1]{0:T(128)S(6)}', space=smem, size = 0x200, scoped, tag = 'scoped memory for tpu_custom_call.1']
  %s0 = inlined_call_operand.hbm [shape: f32[16,8,32], index: 0, kind: input, shape index: {}]
  %s1 = inlined_call_operand.vmem [shape: f32[32,16], index: 1, kind: input, shape index: {}]
  %s2 = inlined_call_operand.vmem [shape: f32[1,16], index: 2, kind: input, shape index: {}]
  %s3 = inlined_call_operand.vmem [shape: f32[1,16], index: 3, kind: input, shape index: {}]
  %s4 = inlined_call_operand.<no memory space> [shape: f32[1], index: 4, kind: input, shape index: {}]
  %s5 = inlined_call_operand.hbm [shape: f32[16,32], index: 5, kind: output, shape index: {0}]
  %s6 = inlined_call_operand.vmem [shape: f32[16,8], index: 6, kind: output, shape index: {1}]
  %7 = xla_tuple %s5, %s6
  %s8 = sld [smem:[#allocation0]]
  $region65: #{tpu_custom_call.1} parent=0
    _
  %s10 = ssub.s32 1, %s8
  %s11 = scalar_select 0, %s10, %s8
  %12 = sst [smem:[#allocation2]] %s4
  $region1: #{tpu_custom_call.1} parent=0
    #allocation3 [shape = 'u8[65536]{0}', space=vmem, size = 0x10000, scoped, tag = 'input window, operand 0']
    #allocation4 [shape = 's32[2]{0}', space=sflag, size = 0x8, scoped, tag = 'scoped memory for tpu_custom_call.1']
    #allocation5 [shape = 's32[2]{0}', space=sflag, size = 0x8, scoped, tag = 'scoped memory for tpu_custom_call.1']
    #allocation6 [shape = 'u8[8192]{0}', space=vmem, size = 0x2000, scoped, tag = 'output window, operand 0']
    %13 = vsyncpa [#allocation4], 0
    %s14 = scalar_lea.sflag [#allocation4], 1
    %15 = vsyncpa %s14, 0
    %16 = vsyncpa [#allocation5], 0
    %s17 = scalar_lea.sflag [#allocation5], 1
    %18 = vsyncpa %s17, 0
    loop: start=0, step=1, limit=4
    $region2: #{tpu_custom_call.1} parent=1 // loop_pre_header
      _
    $region3: #{tpu_custom_call.1} parent=1 // loop_header
      %s20 = sphi 0, %s24
      %p21 = scmp.ge.s32.totalorder %s20, 4
      %s30 = sphi 0, %s32
      %s33 = sphi 0, %s30
      %s34 = sphi 0, %s33
      %s50 = sphi 0, %s34
      %s54 = sphi 0, %s54
      %s56 = sphi 0, %s54
      %s57 = sphi 0, %s56
      %s71 = sphi 0, %s57
      %s75 = sphi 0, %s75
      %s77 = sphi 0, %s75
      %s78 = sphi 0, %s77
      %s92 = sphi 0, %s78
      %s96 = sphi 0, %s96
      %s98 = sphi 0, %s96
      %s99 = sphi 0, %s98
      %s113 = sphi 0, %s99
      %s117 = sphi 0, %s117
      %s119 = sphi 0, %s117
      %s120 = sphi 0, %s119
      %s134 = sphi 0, %s120
      %s140 = sphi 0, %s142
      %s143 = sphi 0, %s140
      %s144 = sphi 0, %s143
      %s160 = sphi 0, %s144
      %s166 = sphi 0, %s168
      %s169 = sphi 0, %s166
      %s170 = sphi 0, %s169
      %s186 = sphi 0, %s170
    $region4: #{tpu_custom_call.1} parent=1 // loop_header_branch
      %23 = sbr.rel (%p21) target = $region8
    $region5: #{tpu_custom_call.1} parent=1 // loop_body
      %s25 = ssub.s32 %s20, 1
      %s26 = ssub.s32 %s20, 2
      %s27 = sadd.s32 %s20, 1
      %s28 = ssub.s32 %s20, %s27
      %p29 = scmp.eq.s32.totalorder %s28, 0
      %s31 = sadd.s32 %s30, 1
      %s32 = scalar_select %p29, %s30, %s31
      %p35 = pneg %p29
      %p36 = scmp.eq.s32.totalorder %s20, 1
      %p37 = por %p35, %p36
      %p38 = scmp.ne.s32.totalorder %s30, %s33
      %p39 = scmp.eq.s32.totalorder %s20, 0
      %p40 = por %p38, %p39
      %p41 = scmp.ne.s32.totalorder %s30, %s33
      %p42 = scmp.eq.s32.totalorder %s25, 1
      %p43 = por %p41, %p42
      %p44 = scmp.ne.s32.totalorder %s33, %s34
      %p45 = scmp.eq.s32.totalorder %s25, 0
      %p46 = por %p44, %p45
      %p47 = scmp.ne.s32.totalorder %s33, %s34
      %p48 = scmp.eq.s32.totalorder %s26, 1
      %p49 = por %p47, %p48
      %p51 = scmp.ne.s32.totalorder %s34, %s50
      %p52 = scmp.eq.s32.totalorder %s26, 0
      %p53 = por %p51, %p52
      %s55 = sadd.s32 %s54, 1
      %p58 = scmp.eq.s32.totalorder %s20, 1
      %p59 = scmp.ne.s32.totalorder %s54, %s56
      %p60 = scmp.eq.s32.totalorder %s20, 0
      %p61 = por %p59, %p60
      %p62 = scmp.ne.s32.totalorder %s54, %s56
      %p63 = scmp.eq.s32.totalorder %s25, 1
      %p64 = por %p62, %p63
      %p65 = scmp.ne.s32.totalorder %s56, %s57
      %p66 = scmp.eq.s32.totalorder %s25, 0
      %p67 = por %p65, %p66
      %p68 = scmp.ne.s32.totalorder %s56, %s57
      %p69 = scmp.eq.s32.totalorder %s26, 1
      %p70 = por %p68, %p69
      %p72 = scmp.ne.s32.totalorder %s57, %s71
      %p73 = scmp.eq.s32.totalorder %s26, 0
      %p74 = por %p72, %p73
      %s76 = sadd.s32 %s75, 1
      %p79 = scmp.eq.s32.totalorder %s20, 1
      %p80 = scmp.ne.s32.totalorder %s75, %s77
      %p81 = scmp.eq.s32.totalorder %s20, 0
      %p82 = por %p80, %p81
      %p83 = scmp.ne.s32.totalorder %s75, %s77
      %p84 = scmp.eq.s32.totalorder %s25, 1
      %p85 = por %p83, %p84
      %p86 = scmp.ne.s32.totalorder %s77, %s78
      %p87 = scmp.eq.s32.totalorder %s25, 0
      %p88 = por %p86, %p87
      %p89 = scmp.ne.s32.totalorder %s77, %s78
      %p90 = scmp.eq.s32.totalorder %s26, 1
      %p91 = por %p89, %p90
      %p93 = scmp.ne.s32.totalorder %s78, %s92
      %p94 = scmp.eq.s32.totalorder %s26, 0
      %p95 = por %p93, %p94
      %s97 = sadd.s32 %s96, 1
      %p100 = scmp.eq.s32.totalorder %s20, 1
      %p101 = scmp.ne.s32.totalorder %s96, %s98
      %p102 = scmp.eq.s32.totalorder %s20, 0
      %p103 = por %p101, %p102
      %p104 = scmp.ne.s32.totalorder %s96, %s98
      %p105 = scmp.eq.s32.totalorder %s25, 1
      %p106 = por %p104, %p105
      %p107 = scmp.ne.s32.totalorder %s98, %s99
      %p108 = scmp.eq.s32.totalorder %s25, 0
      %p109 = por %p107, %p108
      %p110 = scmp.ne.s32.totalorder %s98, %s99
      %p111 = scmp.eq.s32.totalorder %s26, 1
      %p112 = por %p110, %p111
      %p114 = scmp.ne.s32.totalorder %s99, %s113
      %p115 = scmp.eq.s32.totalorder %s26, 0
      %p116 = por %p114, %p115
      %s118 = sadd.s32 %s117, 1
      %p121 = scmp.eq.s32.totalorder %s20, 1
      %p122 = scmp.ne.s32.totalorder %s117, %s119
      %p123 = scmp.eq.s32.totalorder %s20, 0
      %p124 = por %p122, %p123
      %p125 = scmp.ne.s32.totalorder %s117, %s119
      %p126 = scmp.eq.s32.totalorder %s25, 1
      %p127 = por %p125, %p126
      %p128 = scmp.ne.s32.totalorder %s119, %s120
      %p129 = scmp.eq.s32.totalorder %s25, 0
      %p130 = por %p128, %p129
      %p131 = scmp.ne.s32.totalorder %s119, %s120
      %p132 = scmp.eq.s32.totalorder %s26, 1
      %p133 = por %p131, %p132
      %p135 = scmp.ne.s32.totalorder %s120, %s134
      %p136 = scmp.eq.s32.totalorder %s26, 0
      %p137 = por %p135, %p136
      %s138 = ssub.s32 %s20, %s27
      %p139 = scmp.eq.s32.totalorder %s138, 0
      %s141 = sadd.s32 %s140, 1
      %s142 = scalar_select %p139, %s140, %s141
      %p145 = pneg %p139
      %p146 = scmp.eq.s32.totalorder %s20, 1
      %p147 = por %p145, %p146
      %p148 = scmp.ne.s32.totalorder %s140, %s143
      %p149 = scmp.eq.s32.totalorder %s20, 0
      %p150 = por %p148, %p149
      %p151 = scmp.ne.s32.totalorder %s140, %s143
      %p152 = scmp.eq.s32.totalorder %s25, 1
      %p153 = por %p151, %p152
      %p154 = scmp.ne.s32.totalorder %s143, %s144
      %p155 = scmp.eq.s32.totalorder %s25, 0
      %p156 = por %p154, %p155
      %p157 = scmp.ne.s32.totalorder %s143, %s144
      %p158 = scmp.eq.s32.totalorder %s26, 1
      %p159 = por %p157, %p158
      %p161 = scmp.ne.s32.totalorder %s144, %s160
      %p162 = scmp.eq.s32.totalorder %s26, 0
      %p163 = por %p161, %p162
      %s164 = ssub.s32 %s20, %s27
      %p165 = scmp.eq.s32.totalorder %s164, 0
      %s167 = sadd.s32 %s166, 1
      %s168 = scalar_select %p165, %s166, %s167
      %p171 = pneg %p165
      %p172 = scmp.eq.s32.totalorder %s20, 1
      %p173 = por %p171, %p172
      %p174 = scmp.ne.s32.totalorder %s166, %s169
      %p175 = scmp.eq.s32.totalorder %s20, 0
      %p176 = por %p174, %p175
      %p177 = scmp.ne.s32.totalorder %s166, %s169
      %p178 = scmp.eq.s32.totalorder %s25, 1
      %p179 = por %p177, %p178
      %p180 = scmp.ne.s32.totalorder %s169, %s170
      %p181 = scmp.eq.s32.totalorder %s25, 0
      %p182 = por %p180, %p181
      %p183 = scmp.ne.s32.totalorder %s169, %s170
      %p184 = scmp.eq.s32.totalorder %s26, 1
      %p185 = por %p183, %p184
      %p187 = scmp.ne.s32.totalorder %s170, %s186
      %p188 = scmp.eq.s32.totalorder %s26, 0
      %p189 = por %p187, %p188
      %p190 = scmp.le.s32.totalorder 1, %s20
      %p191 = scmp.lt.s32.totalorder %s20, 3
      %p192 = pnand %p190, %p191
      %p193 = pneg %p192
      // Predicated region
      $region9: #{tpu_custom_call.1} parent=5 // pred_check
        _
      $region10: #{tpu_custom_call.1} parent=5 // pred_check_branch
        %195 = sbr.rel (%p192) target = $region12
      $region11: #{tpu_custom_call.1} parent=5 // pred_region
        %s196 = ssub.s32 %s20, 1
        // Predicated region
        $region13: #{tpu_custom_call.1} parent=11 // pred_check
          %p197 = pneg %p67
        $region14: #{tpu_custom_call.1} parent=11 // pred_check_branch
          %199 = sbr.rel (%p197) target = $region16
        $region15: #{tpu_custom_call.1} parent=11 // pred_region
          _
        $region16: #{tpu_custom_call.1} parent=11 // pred_fallthru
          _
        // Predicated region
        $region17: #{tpu_custom_call.1} parent=11 // pred_check
          %p200 = pneg %p88
        $region18: #{tpu_custom_call.1} parent=11 // pred_check_branch
          %202 = sbr.rel (%p200) target = $region20
        $region19: #{tpu_custom_call.1} parent=11 // pred_region
          _
        $region20: #{tpu_custom_call.1} parent=11 // pred_fallthru
          _
        // Predicated region
        $region21: #{tpu_custom_call.1} parent=11 // pred_check
          %p203 = pneg %p109
        $region22: #{tpu_custom_call.1} parent=11 // pred_check_branch
          %205 = sbr.rel (%p203) target = $region24
        $region23: #{tpu_custom_call.1} parent=11 // pred_region
          _
        $region24: #{tpu_custom_call.1} parent=11 // pred_fallthru
          _
        // Predicated region
        $region25: #{tpu_custom_call.1} parent=11 // pred_check
          %p206 = pneg %p130
        $region26: #{tpu_custom_call.1} parent=11 // pred_check_branch
          %208 = sbr.rel (%p206) target = $region28
        $region27: #{tpu_custom_call.1} parent=11 // pred_region
          _
        $region28: #{tpu_custom_call.1} parent=11 // pred_fallthru
          _
      $region12: #{tpu_custom_call.1} parent=5 // pred_fallthru
        _
      %p209 = scmp.lt.s32.totalorder %s20, 2
      // Predicated region
      $region29: #{tpu_custom_call.1} parent=5 // pred_check
        %p210 = pneg %p209
      $region30: #{tpu_custom_call.1} parent=5 // pred_check_branch
        %212 = sbr.rel (%p210) target = $region32
      $region31: #{tpu_custom_call.1} parent=5 // pred_region
        // Predicated region
        $region33: #{tpu_custom_call.1} parent=31 // pred_check
          %p213 = pneg %p40
        $region34: #{tpu_custom_call.1} parent=31 // pred_check_branch
          %215 = sbr.rel (%p213) target = $region36
        $region35: #{tpu_custom_call.1} parent=31 // pred_region
          %s216 = sand.u32 %s30, 1
          %s217 = scalar_lea.sflag [#allocation4], %s216
          %s218 = sand.u32 %s30, 1
          %s219 = smul.addr %s218, 64
          %s220 = scalar_lea.vmem [#allocation3], %s219
          %s221 = smul.u32 8, %s20
          %s223 = ssub.s32 1024, 1024
          %224 = vsyncadd %s217, %s223
          %s225 = smul.addr %s221, 128
          %s226 = scalar_lea.hbm %s0, %s225
          %s227 = sshll.u32 %s220, 4
          %s228 = int_to_ptr.vmem [resolvable:$true] %s227
          %233 = dma.hbm_to_vmem [thread:$0]  %s226, 1024, %s228, %s217, 128, 128, 8
        $region36: #{tpu_custom_call.1} parent=31 // pred_fallthru
          _
      $region32: #{tpu_custom_call.1} parent=5 // pred_fallthru
        _
      %p234 = scmp.le.s32.totalorder 1, %s20
      %p235 = scmp.lt.s32.totalorder %s20, 3
      %p236 = pnand %p234, %p235
      %p237 = pneg %p236
      // Predicated region
      $region37: #{tpu_custom_call.1} parent=5 // pred_check
        _
      $region38: #{tpu_custom_call.1} parent=5 // pred_check_branch
        %239 = sbr.rel (%p236) target = $region40
      $region39: #{tpu_custom_call.1} parent=5 // pred_region
        %s240 = ssub.s32 %s20, 1
        %s241 = sand.u32 %s33, 1
        %s242 = scalar_lea.sflag [#allocation4], %s241
        %s243 = sand.u32 %s33, 1
        %s244 = smul.addr %s243, 64
        %s245 = scalar_lea.vmem [#allocation3], %s244
        // Predicated region
        $region41: #{tpu_custom_call.1} parent=39 // pred_check
          %p246 = pneg %p46
        $region42: #{tpu_custom_call.1} parent=39 // pred_check_branch
          %248 = sbr.rel (%p246) target = $region44
        $region43: #{tpu_custom_call.1} parent=39 // pred_region
          %249 = dma.done %s242, 1024
        $region44: #{tpu_custom_call.1} parent=39 // pred_fallthru
          _
        %s250 = sand.u32 %s33, 1
        %s251 = scalar_lea.sflag [#allocation4], %s250
        %s252 = sand.u32 %s33, 1
        %s253 = smul.addr %s252, 64
        %s254 = scalar_lea.vmem [#allocation3], %s253
        %p255 = pneg %p46
        %p256 = pneg %p43
        %p257 = pneg %p67
        %p258 = pneg %p64
        %p259 = pneg %p88
        %p260 = pneg %p85
        %p261 = pneg %p109
        %p262 = pneg %p106
        %p263 = pneg %p130
        %p264 = pneg %p127
        %p265 = pneg %p156
        %p266 = pneg %p153
        %s267 = sand.u32 %s143, 1
        %s268 = scalar_lea.sflag [#allocation5], %s267
        %s269 = sand.u32 %s143, 1
        %s270 = smul.addr %s269, 8
        %s271 = scalar_lea.vmem [#allocation6], %s270
        %p272 = pneg %p182
        %p273 = pneg %p179
        %p274 = scmp.lt.s32.totalorder %s25, 1
        %s275 = scalar_select %p274, %s25, 1
        %s276 = smul.addr %s275, 8
        %s277 = scalar_lea.vmem %s6, %s276
        %s278 = smul.u32 8, %s25
        %p279 = scmp.lt.s32.totalorder %s25, 1
        %s280 = scalar_select %p279, %s25, 1
        %s281 = smul.addr %s280, 8
        %s282 = scalar_lea.vmem %s6, %s281
        %v283 = vld [vmem:[%s245] sm:$0xff]
        %v284 = vld [vmem:[%s245 + $0x8] sm:$0xff]
        %v285 = vld [vmem:[%s245 + $0x10] sm:$0xff]
        %v286 = vld [vmem:[%s245 + $0x18] sm:$0xff]
        %v287 = vld [vmem:[%s245 + $0x20] sm:$0xff]
        %v288 = vld [vmem:[%s245 + $0x28] sm:$0xff]
        %v289 = vld [vmem:[%s245 + $0x30] sm:$0xff]
        %v290 = vld [vmem:[%s245 + $0x38] sm:$0xff]
        %v291 = vld [vmem:[%s1] sm:$0xff]
        %v292 = vld [vmem:[%s1 + $0x8] sm:$0xff]
        %v293 = vld [vmem:[%s1 + $0x10] sm:$0xff]
        %v294 = vld [vmem:[%s1 + $0x18] sm:$0xff]
        %v295 = vld [vmem:[%s2] sm:$0x1]
        %v297 = vlaneseq
        %v298 = vshrl.u32 %v297, 7
        %v299 = vsub.s32 0, %v298
        %v300 = vrot.slane %v295, %v299
        %vm302 = vcmask 261120
        %v304 = vsel %vm302, %v283, 0
        %v307 = vsel %vm302, %v284, 0
        %v310 = vsel %vm302, %v285, 0
        %v313 = vsel %vm302, %v286, 0
        %v316 = vsel %vm302, %v287, 0
        %v319 = vsel %vm302, %v288, 0
        %v322 = vsel %vm302, %v289, 0
        %v325 = vsel %vm302, %v290, 0
        %327 = vmatprep.subr.mxu0 0.0
        %328 = vmatpush1.msra.mxu0 0.0
        %329 = vmatprep.subr.mxu0 0.0
        %330 = vmatpush1.msra.mxu0 0.0
        %331 = vmatprep.subr.mxu0 0.0
        %332 = vmatpush1.msra.mxu0 0.0
        %333 = vmatprep.subr.mxu0 0.0
        %334 = vmatpush1.msra.mxu0 0.0
        %335 = vmatprep.subr.mxu0 0.0
        %336 = vmatpush1.msra.mxu0 0.0
        %337 = vmatprep.subr.mxu0 0.0
        %338 = vmatpush1.msra.mxu0 0.0
        %339 = vmatprep.subr.mxu0 0.0
        %340 = vmatpush1.msra.mxu0 0.0
        %341 = vmatprep.subr.mxu0 0.0
        %342 = vmatpush1.msra.mxu0 0.0
        %343 = vmatprep.subr.mxu0 0.0
        %344 = vmatpush1.msra.mxu0 0.0
        %345 = vmatprep.subr.mxu0 0.0
        %346 = vmatpush1.msra.mxu0 0.0
        %347 = vmatprep.subr.mxu0 0.0
        %348 = vmatpush1.msra.mxu0 0.0
        %349 = vmatprep.subr.mxu0 0.0
        %350 = vmatpush1.msra.mxu0 0.0
        %351 = vmatprep.subr.mxu0 0.0
        %352 = vmatpush1.msra.mxu0 %v294
        %353 = vmatprep.subr.mxu0 0.0
        %354 = vmatpush1.msra.mxu0 %v293
        %355 = vmatprep.subr.mxu0 0.0
        %356 = vmatpush1.msra.mxu0 %v292
        %357 = vmatprep.subr.mxu0 0.0
        %358 = vmatpush1.msra.mxu0 %v291
        %359 = vmatprep.subr.mxu0 0.0
        %360 = vmatpush2.msra.mxu0 0.0
        %361 = vmatprep.subr.mxu0 0.0
        %362 = vmatpush2.msra.mxu0 0.0
        %363 = vmatprep.subr.mxu0 0.0
        %364 = vmatpush2.msra.mxu0 0.0
        %365 = vmatprep.subr.mxu0 0.0
        %366 = vmatpush2.msra.mxu0 0.0
        %367 = vmatprep.subr.mxu0 0.0
        %368 = vmatpush2.msra.mxu0 0.0
        %369 = vmatprep.subr.mxu0 0.0
        %370 = vmatpush2.msra.mxu0 0.0
        %371 = vmatprep.subr.mxu0 0.0
        %372 = vmatpush2.msra.mxu0 0.0
        %373 = vmatprep.subr.mxu0 0.0
        %374 = vmatpush2.msra.mxu0 0.0
        %375 = vmatprep.subr.mxu0 0.0
        %376 = vmatpush2.msra.mxu0 0.0
        %377 = vmatprep.subr.mxu0 0.0
        %378 = vmatpush2.msra.mxu0 0.0
        %379 = vmatprep.subr.mxu0 0.0
        %380 = vmatpush2.msra.mxu0 0.0
        %381 = vmatprep.subr.mxu0 0.0
        %382 = vmatpush2.msra.mxu0 0.0
        %383 = vmatprep.subr.mxu0 0.0
        %384 = vmatpush2.msra.mxu0 0.0
        %385 = vmatprep.subr.mxu0 0.0
        %386 = vmatpush2.msra.mxu0 0.0
        %387 = vmatprep.subr.mxu0 0.0
        %388 = vmatpush2.msra.mxu0 0.0
        %389 = vmatprep.subr.mxu0 0.0
        %390 = vmatpush2.msra.mxu0 0.0
        %391 = vmatprep.mubr.f32.mxu0 0.0
        %392 = vmatmul.mubr.f32.gmra.mxu0 %v304
        %v393 = vpop.f32.mrf.mxu0
        %v394 = vadd.f32 %v300, %v393
        %v395 = vpop.f32.mrf.mxu0
        %396 = vmatprep.mubr.f32.mxu0 0.0
        %397 = vmatmul.mubr.f32.gmra.mxu0 %v307
        %v398 = vpop.f32.mrf.mxu0
        %v399 = vadd.f32 %v300, %v398
        %v400 = vpop.f32.mrf.mxu0
        %401 = vmatprep.mubr.f32.mxu0 0.0
        %402 = vmatmul.mubr.f32.gmra.mxu0 %v310
        %v403 = vpop.f32.mrf.mxu0
        %v404 = vadd.f32 %v300, %v403
        %v405 = vpop.f32.mrf.mxu0
        %406 = vmatprep.mubr.f32.mxu0 0.0
        %407 = vmatmul.mubr.f32.gmra.mxu0 %v313
        %v408 = vpop.f32.mrf.mxu0
        %v409 = vadd.f32 %v300, %v408
        %v410 = vpop.f32.mrf.mxu0
        %411 = vmatprep.mubr.f32.mxu0 0.0
        %412 = vmatmul.mubr.f32.gmra.mxu0 %v316
        %v413 = vpop.f32.mrf.mxu0
        %v414 = vadd.f32 %v300, %v413
        %v415 = vpop.f32.mrf.mxu0
        %416 = vmatprep.mubr.f32.mxu0 0.0
        %417 = vmatmul.mubr.f32.gmra.mxu0 %v319
        %v418 = vpop.f32.mrf.mxu0
        %v419 = vadd.f32 %v300, %v418
        %v420 = vpop.f32.mrf.mxu0
        %421 = vmatprep.mubr.f32.mxu0 0.0
        %422 = vmatmul.mubr.f32.gmra.mxu0 %v322
        %v423 = vpop.f32.mrf.mxu0
        %v424 = vadd.f32 %v300, %v423
        %v425 = vpop.f32.mrf.mxu0
        %426 = vmatprep.mubr.f32.mxu0 0.0
        %427 = vmatmul.mubr.f32.gmra.mxu0 %v325
        %v428 = vpop.f32.mrf.mxu0
        %v429 = vadd.f32 %v300, %v428
        %v430 = vpop.f32.mrf.mxu0
        %431 = vdwg.mxu0
        %v432 = vmax.f32 %v394, 0.0
        %v433 = vmax.f32 %v399, 0.0
        %v434 = vmax.f32 %v404, 0.0
        %v435 = vmax.f32 %v409, 0.0
        %v436 = vmax.f32 %v414, 0.0
        %v437 = vmax.f32 %v419, 0.0
        %v438 = vmax.f32 %v424, 0.0
        %v439 = vmax.f32 %v429, 0.0
        %v440 = vld [vmem:[%s3] sm:$0x1]
        %v442 = vlaneseq
        %v443 = vshrl.u32 %v442, 7
        %v444 = vsub.s32 0, %v443
        %v445 = vrot.slane %v440, %v444
        %v447 = vmul.f32 %v432, %v445
        %v448 = vmul.f32 %v433, %v445
        %v449 = vmul.f32 %v434, %v445
        %v450 = vmul.f32 %v435, %v445
        %v451 = vmul.f32 %v436, %v445
        %v452 = vmul.f32 %v437, %v445
        %v453 = vmul.f32 %v438, %v445
        %v454 = vmul.f32 %v439, %v445
        %vm455 = vcmask 130048
        %v456 = vsel %vm455, %v447, 0.0
        %457 = vadd.xlane.f32.xlu0 %v456
        %v458 = vpop.xlane.xlu0 %457
        %v459 = vsel %vm455, %v448, 0.0
        %460 = vadd.xlane.f32.xlu0 %v459
        %v461 = vpop.xlane.xlu0 %460
        %v462 = vsel %vm455, %v449, 0.0
        %463 = vadd.xlane.f32.xlu0 %v462
        %v464 = vpop.xlane.xlu0 %463
        %v465 = vsel %vm455, %v450, 0.0
        %466 = vadd.xlane.f32.xlu0 %v465
        %v467 = vpop.xlane.xlu0 %466
        %v468 = vsel %vm455, %v451, 0.0
        %469 = vadd.xlane.f32.xlu0 %v468
        %v470 = vpop.xlane.xlu0 %469
        %v471 = vsel %vm455, %v452, 0.0
        %472 = vadd.xlane.f32.xlu0 %v471
        %v473 = vpop.xlane.xlu0 %472
        %v474 = vsel %vm455, %v453, 0.0
        %475 = vadd.xlane.f32.xlu0 %v474
        %v476 = vpop.xlane.xlu0 %475
        %v477 = vsel %vm455, %v454, 0.0
        %478 = vadd.xlane.f32.xlu0 %v477
        %v479 = vpop.xlane.xlu0 %478
        %s480 = sld [smem:[#allocation2]]
        %v481 = vstv %s480
        %v482 = vadd.f32 %v458, %v481
        %v483 = vadd.f32 %v461, %v481
        %v484 = vadd.f32 %v464, %v481
        %v485 = vadd.f32 %v467, %v481
        %v486 = vadd.f32 %v470, %v481
        %v487 = vadd.f32 %v473, %v481
        %v488 = vadd.f32 %v476, %v481
        %v489 = vadd.f32 %v479, %v481
        %v498 = vlaneseq
        %v499 = vand.u32 %v498, 127
        %v500 = vlaneseq
        %v501 = vshrl.u32 %v500, 7
        %v502 = vsub.s32 %v499, %v501
        %v503 = vrot.slane %v482, %v502
        %v504 = vlaneseq
        %v505 = vshrl.u32 %v504, 7
        %v506 = vsub.s32 %v499, %v505
        %v507 = vrot.slane %v483, %v506
        %v508 = vlaneseq
        %v509 = vshrl.u32 %v508, 7
        %v510 = vsub.s32 %v499, %v509
        %v511 = vrot.slane %v484, %v510
        %v512 = vlaneseq
        %v513 = vshrl.u32 %v512, 7
        %v514 = vsub.s32 %v499, %v513
        %v515 = vrot.slane %v485, %v514
        %v516 = vlaneseq
        %v517 = vshrl.u32 %v516, 7
        %v518 = vsub.s32 %v499, %v517
        %v519 = vrot.slane %v486, %v518
        %v520 = vlaneseq
        %v521 = vshrl.u32 %v520, 7
        %v522 = vsub.s32 %v499, %v521
        %v523 = vrot.slane %v487, %v522
        %v524 = vlaneseq
        %v525 = vshrl.u32 %v524, 7
        %v526 = vsub.s32 %v499, %v525
        %v527 = vrot.slane %v488, %v526
        %v528 = vlaneseq
        %v529 = vshrl.u32 %v528, 7
        %v530 = vsub.s32 %v499, %v529
        %v531 = vrot.slane %v489, %v530
        %vm532 = vcmask 1041409
        %v533 = vsel %vm532, %v507, %v503
        %vm534 = vcmask 1042434
        %v535 = vsel %vm534, %v511, %v533
        %vm536 = vcmask 1043459
        %v537 = vsel %vm536, %v515, %v535
        %vm538 = vcmask 1044484
        %v539 = vsel %vm538, %v519, %v537
        %vm540 = vcmask 1045509
        %v541 = vsel %vm540, %v523, %v539
        %vm542 = vcmask 1046534
        %v543 = vsel %vm542, %v527, %v541
        %vm544 = vcmask 1047559
        %v545 = vsel %vm544, %v531, %v543
        %vm547 = vcmask 64512
        %v548 = vsel %vm547, %v545, -inf
        %549 = vmax.xlane.f32.xlu0 %v548
        %v550 = vpop.xlane.xlu0 %549
        %v552 = vlaneseq
        %v553 = vshrl.u32 %v552, 7
        %v554 = vsub.s32 0, %v553
        %v555 = vrot.slane %v550, %v554
        %v556 = vlaneseq
        %v557 = vshrl.u32 %v556, 7
        %v558 = vsub.s32 1, %v557
        %v559 = vrot.slane %v550, %v558
        %v560 = vlaneseq
        %v561 = vshrl.u32 %v560, 7
        %v562 = vsub.s32 2, %v561
        %v563 = vrot.slane %v550, %v562
        %v564 = vlaneseq
        %v565 = vshrl.u32 %v564, 7
        %v566 = vsub.s32 3, %v565
        %v567 = vrot.slane %v550, %v566
        %v568 = vlaneseq
        %v569 = vshrl.u32 %v568, 7
        %v570 = vsub.s32 4, %v569
        %v571 = vrot.slane %v550, %v570
        %v572 = vlaneseq
        %v573 = vshrl.u32 %v572, 7
        %v574 = vsub.s32 5, %v573
        %v575 = vrot.slane %v550, %v574
        %v576 = vlaneseq
        %v577 = vshrl.u32 %v576, 7
        %v578 = vsub.s32 6, %v577
        %v579 = vrot.slane %v550, %v578
        %v580 = vlaneseq
        %v581 = vshrl.u32 %v580, 7
        %v582 = vsub.s32 7, %v581
        %v583 = vrot.slane %v550, %v582
        %v592 = vsub.f32 %v482, %v555
        %v593 = vsub.f32 %v483, %v559
        %v594 = vsub.f32 %v484, %v563
        %v595 = vsub.f32 %v485, %v567
        %v596 = vsub.f32 %v486, %v571
        %v597 = vsub.f32 %v487, %v575
        %v598 = vsub.f32 %v488, %v579
        %v599 = vsub.f32 %v489, %v583
        %v600 = vmul.f32 %v592, 1.442695
        %v601 = vpow.pop %v600
        %v602 = vmul.f32 %v593, 1.442695
        %v603 = vpow.pop %v602
        %v604 = vmul.f32 %v594, 1.442695
        %v605 = vpow.pop %v604
        %v606 = vmul.f32 %v595, 1.442695
        %v607 = vpow.pop %v606
        %v608 = vmul.f32 %v596, 1.442695
        %v609 = vpow.pop %v608
        %v610 = vmul.f32 %v597, 1.442695
        %v611 = vpow.pop %v610
        %v612 = vmul.f32 %v598, 1.442695
        %v613 = vpow.pop %v612
        %v614 = vmul.f32 %v599, 1.442695
        %v615 = vpow.pop %v614
        %624 = vset.pattern.permute.xlu0 0
        %625 = vperm.xlu0 %624, %v601
        %v626 = vpop.permute.xlu0 %625
        %627 = vset.pattern.permute.xlu0 0
        %628 = vperm.xlu0 %627, %v603
        %v629 = vpop.permute.xlu0 %628
        %630 = vset.pattern.permute.xlu0 0
        %631 = vperm.xlu0 %630, %v605
        %v632 = vpop.permute.xlu0 %631
        %633 = vset.pattern.permute.xlu0 0
        %634 = vperm.xlu0 %633, %v607
        %v635 = vpop.permute.xlu0 %634
        %636 = vset.pattern.permute.xlu0 0
        %637 = vperm.xlu0 %636, %v609
        %v638 = vpop.permute.xlu0 %637
        %639 = vset.pattern.permute.xlu0 0
        %640 = vperm.xlu0 %639, %v611
        %v641 = vpop.permute.xlu0 %640
        %642 = vset.pattern.permute.xlu0 0
        %643 = vperm.xlu0 %642, %v613
        %v644 = vpop.permute.xlu0 %643
        %645 = vset.pattern.permute.xlu0 0
        %646 = vperm.xlu0 %645, %v615
        %v647 = vpop.permute.xlu0 %646
        %v648 = vlaneseq
        %v649 = vshrl.u32 %v648, 7
        %v650 = vsub.s32 %v499, %v649
        %v651 = vrot.slane %v626, %v650
        %v652 = vlaneseq
        %v653 = vshrl.u32 %v652, 7
        %v654 = vsub.s32 %v499, %v653
        %v655 = vrot.slane %v629, %v654
        %v656 = vlaneseq
        %v657 = vshrl.u32 %v656, 7
        %v658 = vsub.s32 %v499, %v657
        %v659 = vrot.slane %v632, %v658
        %v660 = vlaneseq
        %v661 = vshrl.u32 %v660, 7
        %v662 = vsub.s32 %v499, %v661
        %v663 = vrot.slane %v635, %v662
        %v664 = vlaneseq
        %v665 = vshrl.u32 %v664, 7
        %v666 = vsub.s32 %v499, %v665
        %v667 = vrot.slane %v638, %v666
        %v668 = vlaneseq
        %v669 = vshrl.u32 %v668, 7
        %v670 = vsub.s32 %v499, %v669
        %v671 = vrot.slane %v641, %v670
        %v672 = vlaneseq
        %v673 = vshrl.u32 %v672, 7
        %v674 = vsub.s32 %v499, %v673
        %v675 = vrot.slane %v644, %v674
        %v676 = vlaneseq
        %v677 = vshrl.u32 %v676, 7
        %v678 = vsub.s32 %v499, %v677
        %v679 = vrot.slane %v647, %v678
        %v680 = vsel %vm532, %v655, %v651
        %v681 = vsel %vm534, %v659, %v680
        %v682 = vsel %vm536, %v663, %v681
        %v683 = vsel %vm538, %v667, %v682
        %v684 = vsel %vm540, %v671, %v683
        %v685 = vsel %vm542, %v675, %v684
        %v686 = vsel %vm544, %v679, %v685
        %v688 = vsel %vm547, %v686, 0.0
        %689 = vadd.xlane.f32.xlu0 %v688
        %v690 = vpop.xlane.xlu0 %689
        %v691 = vrcp.pop %v690
        %v693 = vlaneseq
        %v694 = vshrl.u32 %v693, 7
        %v695 = vsub.s32 0, %v694
        %v696 = vrot.slane %v691, %v695
        %v697 = vlaneseq
        %v698 = vshrl.u32 %v697, 7
        %v699 = vsub.s32 1, %v698
        %v700 = vrot.slane %v691, %v699
        %v701 = vlaneseq
        %v702 = vshrl.u32 %v701, 7
        %v703 = vsub.s32 2, %v702
        %v704 = vrot.slane %v691, %v703
        %v705 = vlaneseq
        %v706 = vshrl.u32 %v705, 7
        %v707 = vsub.s32 3, %v706
        %v708 = vrot.slane %v691, %v707
        %v709 = vlaneseq
        %v710 = vshrl.u32 %v709, 7
        %v711 = vsub.s32 4, %v710
        %v712 = vrot.slane %v691, %v711
        %v713 = vlaneseq
        %v714 = vshrl.u32 %v713, 7
        %v715 = vsub.s32 5, %v714
        %v716 = vrot.slane %v691, %v715
        %v717 = vlaneseq
        %v718 = vshrl.u32 %v717, 7
        %v719 = vsub.s32 6, %v718
        %v720 = vrot.slane %v691, %v719
        %v721 = vlaneseq
        %v722 = vshrl.u32 %v721, 7
        %v723 = vsub.s32 7, %v722
        %v724 = vrot.slane %v691, %v723
        %v733 = vmul.f32 %v601, %v696
        %v734 = vmul.f32 %v603, %v700
        %v735 = vmul.f32 %v605, %v704
        %v736 = vmul.f32 %v607, %v708
        %v737 = vmul.f32 %v609, %v712
        %v738 = vmul.f32 %v611, %v716
        %v739 = vmul.f32 %v613, %v720
        %v740 = vmul.f32 %v615, %v724
        %742 = vset.pattern.permute.xlu0 0
        %743 = vperm.xlu0 %742, %v733
        %v744 = vpop.permute.xlu0 %743
        %747 = vset.pattern.permute.xlu0 0
        %748 = vperm.xlu0 %747, %v734
        %v749 = vpop.permute.xlu0 %748
        %752 = vset.pattern.permute.xlu0 0
        %753 = vperm.xlu0 %752, %v735
        %v754 = vpop.permute.xlu0 %753
        %757 = vset.pattern.permute.xlu0 0
        %758 = vperm.xlu0 %757, %v736
        %v759 = vpop.permute.xlu0 %758
        %762 = vset.pattern.permute.xlu0 0
        %763 = vperm.xlu0 %762, %v737
        %v764 = vpop.permute.xlu0 %763
        %767 = vset.pattern.permute.xlu0 0
        %768 = vperm.xlu0 %767, %v738
        %v769 = vpop.permute.xlu0 %768
        %772 = vset.pattern.permute.xlu0 0
        %773 = vperm.xlu0 %772, %v739
        %v774 = vpop.permute.xlu0 %773
        %777 = vset.pattern.permute.xlu0 0
        %778 = vperm.xlu0 %777, %v740
        %v779 = vpop.permute.xlu0 %778
        %v781 = vmul.f32 %v283, %v744
        %v782 = vmul.f32 %v284, %v749
        %v783 = vmul.f32 %v285, %v754
        %v784 = vmul.f32 %v286, %v759
        %v785 = vmul.f32 %v287, %v764
        %v786 = vmul.f32 %v288, %v769
        %v787 = vmul.f32 %v289, %v774
        %v788 = vmul.f32 %v290, %v779
        %v789 = vsel %vm302, %v781, 0.0
        %v790 = vrot.slane %v789, 4
        %v791 = vadd.f32 %v789, %v790
        %v792 = vrot.slane %v791, 2
        %v793 = vadd.f32 %v791, %v792
        %v794 = vrot.slane %v793, 1
        %v795 = vadd.f32 %v793, %v794
        %v796 = vsel %vm302, %v782, 0.0
        %v797 = vrot.slane %v796, 4
        %v798 = vadd.f32 %v796, %v797
        %v799 = vrot.slane %v798, 2
        %v800 = vadd.f32 %v798, %v799
        %v801 = vrot.slane %v800, 1
        %v802 = vadd.f32 %v800, %v801
        %v803 = vsel %vm302, %v783, 0.0
        %v804 = vrot.slane %v803, 4
        %v805 = vadd.f32 %v803, %v804
        %v806 = vrot.slane %v805, 2
        %v807 = vadd.f32 %v805, %v806
        %v808 = vrot.slane %v807, 1
        %v809 = vadd.f32 %v807, %v808
        %v810 = vsel %vm302, %v784, 0.0
        %v811 = vrot.slane %v810, 4
        %v812 = vadd.f32 %v810, %v811
        %v813 = vrot.slane %v812, 2
        %v814 = vadd.f32 %v812, %v813
        %v815 = vrot.slane %v814, 1
        %v816 = vadd.f32 %v814, %v815
        %v817 = vsel %vm302, %v785, 0.0
        %v818 = vrot.slane %v817, 4
        %v819 = vadd.f32 %v817, %v818
        %v820 = vrot.slane %v819, 2
        %v821 = vadd.f32 %v819, %v820
        %v822 = vrot.slane %v821, 1
        %v823 = vadd.f32 %v821, %v822
        %v824 = vsel %vm302, %v786, 0.0
        %v825 = vrot.slane %v824, 4
        %v826 = vadd.f32 %v824, %v825
        %v827 = vrot.slane %v826, 2
        %v828 = vadd.f32 %v826, %v827
        %v829 = vrot.slane %v828, 1
        %v830 = vadd.f32 %v828, %v829
        %v831 = vsel %vm302, %v787, 0.0
        %v832 = vrot.slane %v831, 4
        %v833 = vadd.f32 %v831, %v832
        %v834 = vrot.slane %v833, 2
        %v835 = vadd.f32 %v833, %v834
        %v836 = vrot.slane %v835, 1
        %v837 = vadd.f32 %v835, %v836
        %v838 = vsel %vm302, %v788, 0.0
        %v839 = vrot.slane %v838, 4
        %v840 = vadd.f32 %v838, %v839
        %v841 = vrot.slane %v840, 2
        %v842 = vadd.f32 %v840, %v841
        %v843 = vrot.slane %v842, 1
        %v844 = vadd.f32 %v842, %v843
        %v853 = vsel %vm532, %v802, %v795
        %v854 = vsel %vm534, %v809, %v853
        %v855 = vsel %vm536, %v816, %v854
        %v856 = vsel %vm538, %v823, %v855
        %v857 = vsel %vm540, %v830, %v856
        %v858 = vsel %vm542, %v837, %v857
        %v859 = vsel %vm544, %v844, %v858
        %861 = vst.msk [vmem:[%s271] sm:$0xff] %vm302, %v859
        %v862 = vlaneseq
        %v863 = vshrl.u32 %v862, 7
        %v864 = vsub.s32 %v499, %v863
        %v865 = vrot.slane %v744, %v864
        %v866 = vlaneseq
        %v867 = vshrl.u32 %v866, 7
        %v868 = vsub.s32 %v499, %v867
        %v869 = vrot.slane %v749, %v868
        %v870 = vlaneseq
        %v871 = vshrl.u32 %v870, 7
        %v872 = vsub.s32 %v499, %v871
        %v873 = vrot.slane %v754, %v872
        %v874 = vlaneseq
        %v875 = vshrl.u32 %v874, 7
        %v876 = vsub.s32 %v499, %v875
        %v877 = vrot.slane %v759, %v876
        %v878 = vlaneseq
        %v879 = vshrl.u32 %v878, 7
        %v880 = vsub.s32 %v499, %v879
        %v881 = vrot.slane %v764, %v880
        %v882 = vlaneseq
        %v883 = vshrl.u32 %v882, 7
        %v884 = vsub.s32 %v499, %v883
        %v885 = vrot.slane %v769, %v884
        %v886 = vlaneseq
        %v887 = vshrl.u32 %v886, 7
        %v888 = vsub.s32 %v499, %v887
        %v889 = vrot.slane %v774, %v888
        %v890 = vlaneseq
        %v891 = vshrl.u32 %v890, 7
        %v892 = vsub.s32 %v499, %v891
        %v893 = vrot.slane %v779, %v892
        %v894 = vsel %vm532, %v869, %v865
        %v895 = vsel %vm534, %v873, %v894
        %v896 = vsel %vm536, %v877, %v895
        %v897 = vsel %vm538, %v881, %v896
        %v898 = vsel %vm540, %v885, %v897
        %v899 = vsel %vm542, %v889, %v898
        %v900 = vsel %vm544, %v893, %v899
        %902 = vst.msk [vmem:[%s282] sm:$0xff] %vm547, %v900
        %s903 = sand.u32 %s143, 1
        %s904 = scalar_lea.sflag [#allocation5], %s903
        %s905 = sand.u32 %s143, 1
        %s906 = smul.addr %s905, 8
        %s907 = scalar_lea.vmem [#allocation6], %s906
        %p908 = scmp.lt.s32.totalorder %s25, 1
        %s909 = scalar_select %p908, %s25, 1
        %s910 = smul.addr %s909, 8
        %s911 = scalar_lea.vmem %s6, %s910
        // Predicated region
        $region45: #{tpu_custom_call.1} parent=39 // pred_check
          %p912 = pneg %p153
        $region46: #{tpu_custom_call.1} parent=39 // pred_check_branch
          %914 = sbr.rel (%p912) target = $region48
        $region47: #{tpu_custom_call.1} parent=39 // pred_region
          %s916 = ssub.s32 128, 128
          %917 = vsyncadd %s904, %s916
          %s918 = smul.addr %s25, 128
          %s919 = scalar_lea.hbm %s5, %s918
          %s921 = sshll.u32 %s907, 4
          %s922 = int_to_ptr.vmem [resolvable:$true] %s921
          %924 = dma.vmem_to_hbm [thread:$0]  %s922, 128, %s919, %s904
        $region48: #{tpu_custom_call.1} parent=39 // pred_fallthru
          _
        // Predicated region
        $region49: #{tpu_custom_call.1} parent=39 // pred_check
          %p925 = pneg %p179
        $region50: #{tpu_custom_call.1} parent=39 // pred_check_branch
          %927 = sbr.rel (%p925) target = $region52
        $region51: #{tpu_custom_call.1} parent=39 // pred_region
          _
        $region52: #{tpu_custom_call.1} parent=39 // pred_fallthru
          _
      $region40: #{tpu_custom_call.1} parent=5 // pred_fallthru
        _
      %p928 = scmp.le.s32.totalorder 2, %s20
      // Predicated region
      $region53: #{tpu_custom_call.1} parent=5 // pred_check
        %p929 = pneg %p928
      $region54: #{tpu_custom_call.1} parent=5 // pred_check_branch
        %931 = sbr.rel (%p929) target = $region56
      $region55: #{tpu_custom_call.1} parent=5 // pred_region
        %s932 = ssub.s32 %s20, 2
        // Predicated region
        $region57: #{tpu_custom_call.1} parent=55 // pred_check
          %p933 = pneg %p159
        $region58: #{tpu_custom_call.1} parent=55 // pred_check_branch
          %935 = sbr.rel (%p933) target = $region60
        $region59: #{tpu_custom_call.1} parent=55 // pred_region
          %s936 = sand.u32 %s144, 1
          %s937 = scalar_lea.sflag [#allocation5], %s936
          %s938 = sand.u32 %s144, 1
          %s939 = smul.addr %s938, 8
          %s940 = scalar_lea.vmem [#allocation6], %s939
          %941 = dma.done %s937, 128
        $region60: #{tpu_custom_call.1} parent=55 // pred_fallthru
          _
        // Predicated region
        $region61: #{tpu_custom_call.1} parent=55 // pred_check
          %p942 = pneg %p185
        $region62: #{tpu_custom_call.1} parent=55 // pred_check_branch
          %944 = sbr.rel (%p942) target = $region64
        $region63: #{tpu_custom_call.1} parent=55 // pred_region
          %p945 = scmp.lt.s32.totalorder %s26, 1
          %s946 = scalar_select %p945, %s26, 1
          %s947 = smul.addr %s946, 8
          %s948 = scalar_lea.vmem %s6, %s947
        $region64: #{tpu_custom_call.1} parent=55 // pred_fallthru
          _
      $region56: #{tpu_custom_call.1} parent=5 // pred_fallthru
        _
    $region6: #{tpu_custom_call.1} parent=1 // loop_footer
      %s24 = sadd.s32 1, %s20
    $region7: #{tpu_custom_call.1} parent=1 // loop_footer_branch
      %19 = sbr.rel target = $region3
    $region8: #{tpu_custom_call.1} parent=1 // loop_exit
      _
    %949 = vsyncpa [#allocation4], 1
    %s950 = scalar_lea.sflag [#allocation4], 1
    %951 = vsyncpa %s950, 1
    %952 = vsyncpa [#allocation5], 1
    %s953 = scalar_lea.sflag [#allocation5], 1
    %954 = vsyncpa %s953, 1

</llo_original>
